<compile_context>
chip_gen: v7x
topology: tpu7x:2x2x1
jax: 0.10.0
libtpu: 0.0.40
codegen_flags: <defaults>
</compile_context>

<pallas_src>
import numpy as np
import jax
import jax.numpy as jnp
from jax.experimental import pallas as pl
from jax.experimental.pallas import tpu as pltpu


def _ntm_kernel(h_ref, c_ref, w_ref, b_ref, hkr_ref, cout_ref):
    f32 = jnp.float32
    h = h_ref[...]                       # (Np, H)
    C = c_ref[...]                       # (Np, M, F)
    Np, H = h.shape
    _, M, F = C.shape

    # ---- fused h-block matmul: [k | h_r | h_z | h_n | beta_pre] ----
    yh = jnp.dot(h, w_ref[0:H, :], preferred_element_type=f32) + b_ref[0:1, :]   # (Np, P)
    k = yh[:, 0:F]                                        # (Np, F)
    h_r = yh[:, F:F + H]
    h_z = yh[:, F + H:F + 2 * H]
    h_n = yh[:, F + 2 * H:F + 3 * H]
    beta_pre = yh[:, F + 3 * H:F + 3 * H + 1]             # (Np, 1)

    # beta = softplus(beta_pre) + 1  (identical to the torch clamp/log1p form,
    # with half the transcendental pushes)
    beta = jnp.maximum(beta_pre, 0.0) + jnp.log1p(jnp.exp(-jnp.abs(beta_pre))) + 1.0

    # TODO(synk): ut.Identity()/ut.norm_grad are backward-pass hooks; forward is identity.

    # ---- cosine similarity along the feature axis (dim=2) ----
    # (each norm is clamped separately, matching nn.CosineSimilarity)
    eps = 1e-8
    dots = jnp.sum(C * k[:, None, :], axis=2)                                      # (Np, M)
    c_norm = jnp.sqrt(jnp.sum(C * C, axis=2))                                      # (Np, M)
    k_norm = jnp.sqrt(jnp.sum(k * k, axis=1, keepdims=True))                       # (Np, 1)
    s = dots / (jnp.maximum(c_norm, eps) * jnp.maximum(k_norm, eps))               # (Np, M)

    # ---- softmax over memory slots (dim=1) ----
    logits = s * beta
    m = jnp.max(logits, axis=1, keepdims=True)
    p = jnp.exp(logits - m)
    w = p / jnp.sum(p, axis=1, keepdims=True)                                      # (Np, M)

    # ---- read memory: r = w @ C ----
    r = jnp.sum(w[:, :, None] * C, axis=1)                                         # (Np, F)

    # ---- GRUCell(r, h): fused input-gate matmul [i_r | i_z | i_n] ----
    yi = jnp.dot(r, w_ref[H:H + F, :], preferred_element_type=f32) + b_ref[1:2, :]
    i_r = yi[:, 0:H]
    i_z = yi[:, H:2 * H]
    i_n = yi[:, 2 * H:3 * H]

    rg = jax.nn.sigmoid(i_r + h_r)
    zg = jax.nn.sigmoid(i_z + h_z)
    ng = jnp.tanh(i_n + rg * h_n)
    h_o = (1.0 - zg) * ng + zg * h                                                 # (Np, H)

    # ---- write memory: fused [e_pre | v] matmul on h_o ----
    yo = jnp.dot(h_o, w_ref[H + F:H + F + H, :],
                 preferred_element_type=f32) + b_ref[2:3, :]
    e = jax.nn.sigmoid(yo[:, 0:F])                                                 # (Np, F)
    v = yo[:, F:2 * F]                                                             # (Np, F)

    w2 = w[:, :, None]                                                             # (Np, M, 1)
    c_new = C * (1.0 - w2 * e[:, None, :]) + w2 * v[:, None, :]                    # (Np, M, F)

    # ---- lane-contiguous output slab [h_o | k | r | 0-pad] + memory writeback ----
    slab = jnp.concatenate([h_o, k, r], axis=1)                                    # (Np, H+2F)
    pad = hkr_ref.shape[1] - slab.shape[1]
    if pad:  # static padding so the store is unmasked (full 128-lane rows)
        slab = jnp.concatenate([slab, jnp.zeros((Np, pad), f32)], axis=1)
    hkr_ref[...] = slab
    cout_ref[...] = c_new


def _pack_params(params, H, F):
    """Pack all Linear/GRU weights into one (2H+F, P) slab and all biases into
    one (8, P) slab; P = fused h-block width rounded up to a lane multiple."""
    p = params
    P_h = F + 3 * H + 1
    P = ((max(P_h, 3 * H, 2 * F) + 127) // 128) * 128

    def pad_cols(x):
        return jnp.pad(x, ((0, 0), (0, P - x.shape[1])))

    w_h = jnp.concatenate([p["wk"], p["whr"], p["whz"], p["whn"], p["wb"]], axis=1)  # (H, P_h)
    w_i = jnp.concatenate([p["wir"], p["wiz"], p["win"]], axis=1)                    # (F, 3H)
    w_o = jnp.concatenate([p["we"], p["wv"]], axis=1)                                # (H, 2F)
    w_pack = jnp.concatenate([pad_cols(w_h), pad_cols(w_i), pad_cols(w_o)], axis=0)  # (2H+F, P)

    b_h = jnp.concatenate([p["bk"], p["bhr"], p["bhz"], p["bhn"], p["bb"]], axis=1)
    b_i = jnp.concatenate([p["bir"], p["biz"], p["bin"]], axis=1)
    b_o = jnp.concatenate([p["be"], p["bv"]], axis=1)
    b_pack = jnp.concatenate(
        [pad_cols(b_h), pad_cols(b_i), pad_cols(b_o), jnp.zeros((5, P), jnp.float32)],
        axis=0)                                                                      # (8, P)
    return w_pack.astype(jnp.float32), b_pack.astype(jnp.float32)


def ntm_cell_forward(h_prev, C, params):
    N, H = h_prev.shape
    _, M, F = C.shape
    Np = ((N + 7) // 8) * 8                      # fill all 8 sublanes per vreg
    out_w = ((H + 2 * F + 127) // 128) * 128     # lane-dense [h_o | k | r] slab

    h_p = jnp.zeros((Np, H), jnp.float32).at[:N].set(h_prev.astype(jnp.float32))
    C_p = jnp.zeros((Np, M, F), jnp.float32).at[:N].set(C.astype(jnp.float32))
    w_pack, b_pack = _pack_params(params, H, F)

    vmem = pl.BlockSpec(memory_space=pltpu.MemorySpace.VMEM)
    out_shape = (jax.ShapeDtypeStruct((Np, out_w), jnp.float32),       # [h_o | k | r | pad]
                 jax.ShapeDtypeStruct((Np, M, F), jnp.float32))        # C_new

    hkr, C_new = pl.pallas_call(
        _ntm_kernel,
        out_shape=out_shape,
        in_specs=[vmem] * 4,
        out_specs=(vmem, vmem),
    )(h_p, C_p, w_pack, b_pack)

    h_o = hkr[:N, :H]
    k = hkr[:N, H:H + F]
    r = hkr[:N, H + F:H + 2 * F]
    return h_o, C_new[:N], k, r


def _xavier_normal(key, fan_in, fan_out):
    # Generates the (in, out) transposed weight directly; xavier std only
    # depends on (fan_in, fan_out) so this matches nn.init.xavier_normal_.
    std = np.sqrt(2.0 / (fan_in + fan_out))
    return (std * jax.random.normal(key, (fan_in, fan_out))).astype(jnp.float32)


def make_params(key, dim_h_o, feat_dim):
    ks = jax.random.split(key, 24)
    H, F = dim_h_o, feat_dim
    p = {
        "wk": _xavier_normal(ks[0], H, F), "bk": 0.1 * jax.random.normal(ks[1], (1, F)),
        "wb": _xavier_normal(ks[2], H, 1), "bb": 0.1 * jax.random.normal(ks[3], (1, 1)),
        "we": _xavier_normal(ks[4], H, F), "be": 0.1 * jax.random.normal(ks[5], (1, F)),
        "wv": _xavier_normal(ks[6], H, F), "bv": 0.1 * jax.random.normal(ks[7], (1, F)),
        # GRUCell weight_ih (3H, F) split into r/z/n chunks, transposed to (F, H)
        "wir": _xavier_normal(ks[8], F, H), "wiz": _xavier_normal(ks[9], F, H),
        "win": _xavier_normal(ks[10], F, H),
        # GRUCell weight_hh (3H, H) split, transposed to (H, H)
        "whr": _xavier_normal(ks[11], H, H), "whz": _xavier_normal(ks[12], H, H),
        "whn": _xavier_normal(ks[13], H, H),
        "bir": 0.1 * jax.random.normal(ks[14], (1, H)),
        "biz": 0.1 * jax.random.normal(ks[15], (1, H)),
        "bin": 0.1 * jax.random.normal(ks[16], (1, H)),
        "bhr": 0.1 * jax.random.normal(ks[17], (1, H)),
        "bhz": 0.1 * jax.random.normal(ks[18], (1, H)),
        "bhn": 0.1 * jax.random.normal(ks[19], (1, H)),
    }
    return {k: jnp.asarray(v, jnp.float32) for k, v in p.items()}


def ntm_cell_ref(h, C, p):
    """Pure-JAX reference replicating the torch forward (unfused)."""
    k = h @ p["wk"] + p["bk"]
    beta_pre = h @ p["wb"] + p["bb"]
    beta_pos = jnp.maximum(beta_pre, 0.0)
    beta_neg = jnp.minimum(beta_pre, 0.0)
    beta = (jnp.log1p(jnp.exp(beta_neg)) + beta_pos
            + jnp.log1p(jnp.exp(-beta_pos)) + (1.0 - np.log(2.0)))
    eps = 1e-8
    dots = jnp.sum(C * k[:, None, :], axis=2)
    denom = (jnp.maximum(jnp.linalg.norm(C, axis=2), eps)
             * jnp.maximum(jnp.linalg.norm(k, axis=1, keepdims=True), eps))
    s = dots / denom
    w = jax.nn.softmax(s * beta, axis=1)
    r = jnp.einsum("nm,nmf->nf", w, C)
    i_r = r @ p["wir"] + p["bir"]; i_z = r @ p["wiz"] + p["biz"]; i_n = r @ p["win"] + p["bin"]
    h_r = h @ p["whr"] + p["bhr"]; h_z = h @ p["whz"] + p["bhz"]; h_n = h @ p["whn"] + p["bhn"]
    rg = jax.nn.sigmoid(i_r + h_r); zg = jax.nn.sigmoid(i_z + h_z)
    ng = jnp.tanh(i_n + rg * h_n)
    h_o = (1.0 - zg) * ng + zg * h
    e = jax.nn.sigmoid(h_o @ p["we"] + p["be"])
    v = h_o @ p["wv"] + p["bv"]
    C_new = C * (1.0 - w[:, :, None] * e[:, None, :]) + w[:, :, None] * v[:, None, :]
    return h_o, C_new, k, r


if __name__ == "__main__":
    # Small shapes consistent with the module: N batch, dim_h_o hidden, M
    # memory slots (n_objects), feat_dim features.
    N, dim_h_o, feat_dim, n_objects = 2, 32, 32, 8

    key = jax.random.PRNGKey(0)
    kp, kh, kc = jax.random.split(key, 3)
    params = make_params(kp, dim_h_o, feat_dim)
    h_prev = jax.random.normal(kh, (N, dim_h_o), dtype=jnp.float32)
    C = jax.random.normal(kc, (N, n_objects, feat_dim), dtype=jnp.float32)

    fwd = jax.jit(ntm_cell_forward)
    h_o, C_new, k_out, r_out = jax.block_until_ready(fwd(h_prev, C, params))

    # Sanity check against pure-JAX reference.
    h_ref, C_ref, k_ref, r_ref = ntm_cell_ref(h_prev, C, params)
    np.testing.assert_allclose(np.asarray(h_o), np.asarray(h_ref), rtol=1e-5, atol=1e-5)
    np.testing.assert_allclose(np.asarray(C_new), np.asarray(C_ref), rtol=1e-5, atol=1e-5)
    np.testing.assert_allclose(np.asarray(k_out), np.asarray(k_ref), rtol=1e-5, atol=1e-5)
    np.testing.assert_allclose(np.asarray(r_out), np.asarray(r_ref), rtol=1e-5, atol=1e-5)

    print("KERNEL_OK")
</pallas_src>

<mosaic_0001>
module attributes {stable_mosaic.version = 11 : i64} {
  func.func @_ntm_kernel(%arg0: memref<8x32xf32, #tpu.memory_space<vmem>>, %arg1: memref<8x8x32xf32, #tpu.memory_space<vmem>>, %arg2: memref<96x256xf32, #tpu.memory_space<vmem>>, %arg3: memref<8x256xf32, #tpu.memory_space<vmem>>, %arg4: memref<8x128xf32, #tpu.memory_space<vmem>>, %arg5: memref<8x8x32xf32, #tpu.memory_space<vmem>>) attributes {dimension_semantics = [], scalar_prefetch = 0 : i64, scratch_operands = 0 : i64, tpu.core_type = #tpu.core_type<tc>} {
    %c0 = arith.constant 0 : index
    %c0_0 = arith.constant 0 : index
    %0 = vector.load %arg0[%c0, %c0_0] : memref<8x32xf32, #tpu.memory_space<vmem>>, vector<8x32xf32>
    %c0_1 = arith.constant 0 : index
    %c0_2 = arith.constant 0 : index
    %c0_3 = arith.constant 0 : index
    %1 = vector.load %arg1[%c0_1, %c0_2, %c0_3] : memref<8x8x32xf32, #tpu.memory_space<vmem>>, vector<8x8x32xf32>
    %c0_4 = arith.constant 0 : index
    %c0_5 = arith.constant 0 : index
    %2 = vector.load %arg2[%c0_4, %c0_5] : memref<96x256xf32, #tpu.memory_space<vmem>>, vector<32x256xf32>
    %cst = arith.constant dense<0.000000e+00> : vector<8x256xf32>
    %3 = tpu.matmul %0, %2, %cst {dimension_numbers = #tpu.dot_dimension_numbers<[1], [0], [0], [1], [0, 0, 1, 1], [], []>} : vector<8x32xf32>, vector<32x256xf32>, vector<8x256xf32> -> vector<8x256xf32>
    %c0_6 = arith.constant 0 : index
    %c0_7 = arith.constant 0 : index
    %4 = vector.load %arg3[%c0_6, %c0_7] : memref<8x256xf32, #tpu.memory_space<vmem>>, vector<1x256xf32>
    %5 = vector.broadcast %4 : vector<1x256xf32> to vector<8x256xf32>
    %6 = arith.addf %3, %5 : vector<8x256xf32>
    %7 = vector.extract_strided_slice %6 {offsets = [0, 0], sizes = [8, 32], strides = [1, 1]} : vector<8x256xf32> to vector<8x32xf32>
    %8 = vector.extract_strided_slice %6 {offsets = [0, 32], sizes = [8, 32], strides = [1, 1]} : vector<8x256xf32> to vector<8x32xf32>
    %9 = vector.extract_strided_slice %6 {offsets = [0, 64], sizes = [8, 32], strides = [1, 1]} : vector<8x256xf32> to vector<8x32xf32>
    %10 = vector.extract_strided_slice %6 {offsets = [0, 96], sizes = [8, 32], strides = [1, 1]} : vector<8x256xf32> to vector<8x32xf32>
    %11 = vector.extract_strided_slice %6 {offsets = [0, 128], sizes = [8, 1], strides = [1, 1]} : vector<8x256xf32> to vector<8x1xf32>
    %cst_8 = arith.constant 0.000000e+00 : f32
    %12 = vector.broadcast %cst_8 : f32 to vector<8x1xf32>
    %13 = arith.maximumf %11, %12 : vector<8x1xf32>
    %14 = math.absf %11 : vector<8x1xf32>
    %cst_9 = arith.constant 0.000000e+00 : f32
    %15 = vector.broadcast %cst_9 : f32 to vector<8x1xf32>
    %16 = arith.subf %15, %14 : vector<8x1xf32>
    %17 = math.exp %16 : vector<8x1xf32>
    %18 = math.log1p %17 : vector<8x1xf32>
    %19 = arith.addf %13, %18 : vector<8x1xf32>
    %cst_10 = arith.constant 1.000000e+00 : f32
    %20 = vector.broadcast %cst_10 : f32 to vector<8x1xf32>
    %21 = arith.addf %19, %20 : vector<8x1xf32>
    %22 = vector.shape_cast %7 : vector<8x32xf32> to vector<8x1x32xf32>
    %23 = vector.broadcast %22 : vector<8x1x32xf32> to vector<8x8x32xf32>
    %24 = arith.mulf %1, %23 : vector<8x8x32xf32>
    %cst_11 = arith.constant dense<0.000000e+00> : vector<8x8xf32>
    %25 = vector.multi_reduction <add>, %24, %cst_11 [2] : vector<8x8x32xf32> to vector<8x8xf32>
    %26 = arith.mulf %1, %1 : vector<8x8x32xf32>
    %cst_12 = arith.constant dense<0.000000e+00> : vector<8x8xf32>
    %27 = vector.multi_reduction <add>, %26, %cst_12 [2] : vector<8x8x32xf32> to vector<8x8xf32>
    %28 = math.sqrt %27 : vector<8x8xf32>
    %29 = arith.mulf %7, %7 : vector<8x32xf32>
    %cst_13 = arith.constant dense<0.000000e+00> : vector<8xf32>
    %30 = vector.multi_reduction <add>, %29, %cst_13 [1] : vector<8x32xf32> to vector<8xf32>
    %31 = vector.shape_cast %30 : vector<8xf32> to vector<8x1xf32>
    %32 = math.sqrt %31 : vector<8x1xf32>
    %cst_14 = arith.constant 9.99999993E-9 : f32
    %33 = vector.broadcast %cst_14 : f32 to vector<8x8xf32>
    %34 = arith.maximumf %28, %33 : vector<8x8xf32>
    %cst_15 = arith.constant 9.99999993E-9 : f32
    %35 = vector.broadcast %cst_15 : f32 to vector<8x1xf32>
    %36 = arith.maximumf %32, %35 : vector<8x1xf32>
    %37 = vector.broadcast %36 : vector<8x1xf32> to vector<8x8xf32>
    %38 = arith.mulf %34, %37 : vector<8x8xf32>
    %39 = arith.divf %25, %38 : vector<8x8xf32>
    %40 = vector.broadcast %21 : vector<8x1xf32> to vector<8x8xf32>
    %41 = arith.mulf %39, %40 : vector<8x8xf32>
    %cst_16 = arith.constant dense<0xFF800000> : vector<8xf32>
    %42 = vector.multi_reduction <maximumf>, %41, %cst_16 [1] : vector<8x8xf32> to vector<8xf32>
    %43 = vector.shape_cast %42 : vector<8xf32> to vector<8x1xf32>
    %44 = vector.broadcast %43 : vector<8x1xf32> to vector<8x8xf32>
    %45 = arith.subf %41, %44 : vector<8x8xf32>
    %46 = math.exp %45 : vector<8x8xf32>
    %cst_17 = arith.constant dense<0.000000e+00> : vector<8xf32>
    %47 = vector.multi_reduction <add>, %46, %cst_17 [1] : vector<8x8xf32> to vector<8xf32>
    %48 = vector.shape_cast %47 : vector<8xf32> to vector<8x1xf32>
    %49 = vector.broadcast %48 : vector<8x1xf32> to vector<8x8xf32>
    %50 = arith.divf %46, %49 : vector<8x8xf32>
    %51 = vector.shape_cast %50 : vector<8x8xf32> to vector<8x8x1xf32>
    %52 = vector.broadcast %51 : vector<8x8x1xf32> to vector<8x8x32xf32>
    %53 = arith.mulf %52, %1 : vector<8x8x32xf32>
    %cst_18 = arith.constant dense<0.000000e+00> : vector<8x32xf32>
    %54 = vector.multi_reduction <add>, %53, %cst_18 [1] : vector<8x8x32xf32> to vector<8x32xf32>
    %c32 = arith.constant 32 : index
    %c0_19 = arith.constant 0 : index
    %55 = vector.load %arg2[%c32, %c0_19] : memref<96x256xf32, #tpu.memory_space<vmem>>, vector<32x256xf32>
    %cst_20 = arith.constant dense<0.000000e+00> : vector<8x256xf32>
    %56 = tpu.matmul %54, %55, %cst_20 {dimension_numbers = #tpu.dot_dimension_numbers<[1], [0], [0], [1], [0, 0, 1, 1], [], []>} : vector<8x32xf32>, vector<32x256xf32>, vector<8x256xf32> -> vector<8x256xf32>
    %c1 = arith.constant 1 : index
    %c0_21 = arith.constant 0 : index
    %57 = vector.load %arg3[%c1, %c0_21] : memref<8x256xf32, #tpu.memory_space<vmem>>, vector<1x256xf32>
    %58 = vector.broadcast %57 : vector<1x256xf32> to vector<8x256xf32>
    %59 = arith.addf %56, %58 : vector<8x256xf32>
    %60 = vector.extract_strided_slice %59 {offsets = [0, 0], sizes = [8, 32], strides = [1, 1]} : vector<8x256xf32> to vector<8x32xf32>
    %61 = vector.extract_strided_slice %59 {offsets = [0, 32], sizes = [8, 32], strides = [1, 1]} : vector<8x256xf32> to vector<8x32xf32>
    %62 = vector.extract_strided_slice %59 {offsets = [0, 64], sizes = [8, 32], strides = [1, 1]} : vector<8x256xf32> to vector<8x32xf32>
    %63 = arith.addf %60, %8 : vector<8x32xf32>
    %64 = arith.negf %63 : vector<8x32xf32>
    %65 = math.exp %64 : vector<8x32xf32>
    %cst_22 = arith.constant 1.000000e+00 : f32
    %66 = vector.broadcast %cst_22 : f32 to vector<8x32xf32>
    %67 = arith.addf %66, %65 : vector<8x32xf32>
    %68 = arith.divf %66, %67 : vector<8x32xf32>
    %69 = arith.addf %61, %9 : vector<8x32xf32>
    %70 = arith.negf %69 : vector<8x32xf32>
    %71 = math.exp %70 : vector<8x32xf32>
    %cst_23 = arith.constant 1.000000e+00 : f32
    %72 = vector.broadcast %cst_23 : f32 to vector<8x32xf32>
    %73 = arith.addf %72, %71 : vector<8x32xf32>
    %74 = arith.divf %72, %73 : vector<8x32xf32>
    %75 = arith.mulf %68, %10 : vector<8x32xf32>
    %76 = arith.addf %62, %75 : vector<8x32xf32>
    %77 = math.tanh %76 : vector<8x32xf32>
    %cst_24 = arith.constant 1.000000e+00 : f32
    %78 = vector.broadcast %cst_24 : f32 to vector<8x32xf32>
    %79 = arith.subf %78, %74 : vector<8x32xf32>
    %80 = arith.mulf %79, %77 : vector<8x32xf32>
    %81 = arith.mulf %74, %0 : vector<8x32xf32>
    %82 = arith.addf %80, %81 : vector<8x32xf32>
    %c64 = arith.constant 64 : index
    %c0_25 = arith.constant 0 : index
    %83 = vector.load %arg2[%c64, %c0_25] : memref<96x256xf32, #tpu.memory_space<vmem>>, vector<32x256xf32>
    %cst_26 = arith.constant dense<0.000000e+00> : vector<8x256xf32>
    %84 = tpu.matmul %82, %83, %cst_26 {dimension_numbers = #tpu.dot_dimension_numbers<[1], [0], [0], [1], [0, 0, 1, 1], [], []>} : vector<8x32xf32>, vector<32x256xf32>, vector<8x256xf32> -> vector<8x256xf32>
    %c2 = arith.constant 2 : index
    %c0_27 = arith.constant 0 : index
    %85 = vector.load %arg3[%c2, %c0_27] : memref<8x256xf32, #tpu.memory_space<vmem>>, vector<1x256xf32>
    %86 = vector.broadcast %85 : vector<1x256xf32> to vector<8x256xf32>
    %87 = arith.addf %84, %86 : vector<8x256xf32>
    %88 = vector.extract_strided_slice %87 {offsets = [0, 0], sizes = [8, 32], strides = [1, 1]} : vector<8x256xf32> to vector<8x32xf32>
    %89 = arith.negf %88 : vector<8x32xf32>
    %90 = math.exp %89 : vector<8x32xf32>
    %cst_28 = arith.constant 1.000000e+00 : f32
    %91 = vector.broadcast %cst_28 : f32 to vector<8x32xf32>
    %92 = arith.addf %91, %90 : vector<8x32xf32>
    %93 = arith.divf %91, %92 : vector<8x32xf32>
    %94 = vector.extract_strided_slice %87 {offsets = [0, 32], sizes = [8, 32], strides = [1, 1]} : vector<8x256xf32> to vector<8x32xf32>
    %95 = vector.shape_cast %50 : vector<8x8xf32> to vector<8x8x1xf32>
    %96 = vector.shape_cast %93 : vector<8x32xf32> to vector<8x1x32xf32>
    %97 = vector.broadcast %95 : vector<8x8x1xf32> to vector<8x8x32xf32>
    %98 = vector.broadcast %96 : vector<8x1x32xf32> to vector<8x8x32xf32>
    %99 = arith.mulf %97, %98 : vector<8x8x32xf32>
    %cst_29 = arith.constant 1.000000e+00 : f32
    %100 = vector.broadcast %cst_29 : f32 to vector<8x8x32xf32>
    %101 = arith.subf %100, %99 : vector<8x8x32xf32>
    %102 = arith.mulf %1, %101 : vector<8x8x32xf32>
    %103 = vector.shape_cast %94 : vector<8x32xf32> to vector<8x1x32xf32>
    %104 = vector.broadcast %95 : vector<8x8x1xf32> to vector<8x8x32xf32>
    %105 = vector.broadcast %103 : vector<8x1x32xf32> to vector<8x8x32xf32>
    %106 = arith.mulf %104, %105 : vector<8x8x32xf32>
    %107 = arith.addf %102, %106 : vector<8x8x32xf32>
    %108 = tpu.concatenate %82, %7, %54 in 1 : vector<8x32xf32>, vector<8x32xf32>, vector<8x32xf32> -> vector<8x96xf32>
    %cst_30 = arith.constant 0.000000e+00 : f32
    %109 = vector.broadcast %cst_30 : f32 to vector<8x32xf32>
    %110 = tpu.concatenate %108, %109 in 1 : vector<8x96xf32>, vector<8x32xf32> -> vector<8x128xf32>
    %c0_31 = arith.constant 0 : index
    %c0_32 = arith.constant 0 : index
    %111 = vector.load %arg4[%c0_31, %c0_32] : memref<8x128xf32, #tpu.memory_space<vmem>>, vector<8x128xf32>
    tpu.vector_store %arg4[%c0_31, %c0_32], %110 {strides = array<i32>} : memref<8x128xf32, #tpu.memory_space<vmem>>, vector<8x128xf32>,
    %c0_33 = arith.constant 0 : index
    %c0_34 = arith.constant 0 : index
    %c0_35 = arith.constant 0 : index
    %112 = vector.load %arg5[%c0_33, %c0_34, %c0_35] : memref<8x8x32xf32, #tpu.memory_space<vmem>>, vector<8x8x32xf32>
    tpu.vector_store %arg5[%c0_33, %c0_34, %c0_35], %107 {strides = array<i32>} : memref<8x8x32xf32, #tpu.memory_space<vmem>>, vector<8x8x32xf32>,
    return
  }
}

</mosaic_0001>

<llo_original>
// kernel: ntm_cell_forward.1
$region0: #{ntm_cell_forward.1}
  #allocation0 [shape = 'u32[]', space=smem, size = 0x4, offset = 0x4, fixed_abs, tag = 'smem constant byte address 0x4 - core index']
  #allocation1 [shape = 'u32[144,128]{1,0:T(1,128)}', space=vmem, size = 0x12000, scoped, tag = 'internal scratch']
  %s0 = inlined_call_operand.vmem [shape: f32[8,32], index: 0, kind: input, shape index: {}]
  %s1 = inlined_call_operand.vmem [shape: f32[8,8,32], index: 1, kind: input, shape index: {}]
  %s2 = inlined_call_operand.vmem [shape: f32[96,256], index: 2, kind: input, shape index: {}]
  %s3 = inlined_call_operand.vmem [shape: f32[8,256], index: 3, kind: input, shape index: {}]
  %s4 = inlined_call_operand.vmem [shape: f32[8,128], index: 4, kind: output, shape index: {0}]
  %s5 = inlined_call_operand.vmem [shape: f32[8,8,32], index: 5, kind: output, shape index: {1}]
  %6 = xla_tuple %s4, %s5
  %s7 = sld [smem:[#allocation0]]
  $region34: #{ntm_cell_forward.1} parent=0
    _
  %s9 = ssub.s32 1, %s7
  %s10 = scalar_select 0, %s9, %s7
  // Predicated region
  $region2: #{ntm_cell_forward.1} parent=0 // pred_check
    _
  $region3: #{ntm_cell_forward.1} parent=0 // pred_check_branch
    %12 = sbr.rel (0) target = $region5
  $region4: #{ntm_cell_forward.1} parent=0 // pred_region
    _
  $region5: #{ntm_cell_forward.1} parent=0 // pred_fallthru
    _
  // Predicated region
  $region6: #{ntm_cell_forward.1} parent=0 // pred_check
    _
  $region7: #{ntm_cell_forward.1} parent=0 // pred_check_branch
    %14 = sbr.rel (0) target = $region9
  $region8: #{ntm_cell_forward.1} parent=0 // pred_region
    _
  $region9: #{ntm_cell_forward.1} parent=0 // pred_fallthru
    _
  // Predicated region
  $region10: #{ntm_cell_forward.1} parent=0 // pred_check
    _
  $region11: #{ntm_cell_forward.1} parent=0 // pred_check_branch
    %16 = sbr.rel (0) target = $region13
  $region12: #{ntm_cell_forward.1} parent=0 // pred_region
    _
  $region13: #{ntm_cell_forward.1} parent=0 // pred_fallthru
    _
  // Predicated region
  $region14: #{ntm_cell_forward.1} parent=0 // pred_check
    _
  $region15: #{ntm_cell_forward.1} parent=0 // pred_check_branch
    %18 = sbr.rel (0) target = $region17
  $region16: #{ntm_cell_forward.1} parent=0 // pred_region
    _
  $region17: #{ntm_cell_forward.1} parent=0 // pred_fallthru
    _
  %v19 = vld [vmem:[%s0] sm:$0xff]
  %v20 = vld [vmem:[%s1] sm:$0xff]
  %v21 = vld [vmem:[%s1 + $0x8] sm:$0xff]
  %v22 = vld [vmem:[%s1 + $0x10] sm:$0xff]
  %v23 = vld [vmem:[%s1 + $0x18] sm:$0xff]
  %v24 = vld [vmem:[%s1 + $0x20] sm:$0xff]
  %v25 = vld [vmem:[%s1 + $0x28] sm:$0xff]
  %v26 = vld [vmem:[%s1 + $0x30] sm:$0xff]
  %v27 = vld [vmem:[%s1 + $0x38] sm:$0xff]
  %v28 = vld [vmem:[%s2] sm:$0xff]
  %v29 = vld [vmem:[%s2 + $0x8] sm:$0xff]
  %v30 = vld [vmem:[%s2 + $0x10] sm:$0xff]
  %v31 = vld [vmem:[%s2 + $0x18] sm:$0xff]
  %v32 = vld [vmem:[%s2 + $0x20] sm:$0xff]
  %v33 = vld [vmem:[%s2 + $0x28] sm:$0xff]
  %v34 = vld [vmem:[%s2 + $0x30] sm:$0xff]
  %v35 = vld [vmem:[%s2 + $0x38] sm:$0xff]
  %v36 = vld [vmem:[%s3] ss:$8 sm:$0x3]
  %v38 = vlaneseq
  %v39 = vshrl.u32 %v38, 7
  %v40 = vsub.s32 0, %v39
  %v41 = vrot.slane %v36, %v40
  %v42 = vlaneseq
  %v43 = vshrl.u32 %v42, 7
  %v44 = vsub.s32 1, %v43
  %v45 = vrot.slane %v36, %v44
  %vm48 = vcmask 261120
  %v50 = vsel %vm48, %v19, 0
  %52 = vmatprep.subr.mxu0 %v29
  %53 = vmatpush1.msra.mxu0 %v28
  %54 = vmatprep.subr.mxu0 %v31
  %55 = vmatpush1.msra.mxu0 %v30
  %56 = vmatprep.subr.mxu0 %v33
  %57 = vmatpush1.msra.mxu0 %v32
  %58 = vmatprep.subr.mxu0 %v35
  %59 = vmatpush1.msra.mxu0 %v34
  %60 = vmatprep.subr.mxu0 0.0
  %61 = vmatpush1.msra.mxu0 0.0
  %62 = vmatprep.subr.mxu0 0.0
  %63 = vmatpush1.msra.mxu0 0.0
  %64 = vmatprep.subr.mxu0 0.0
  %65 = vmatpush1.msra.mxu0 0.0
  %66 = vmatprep.subr.mxu0 0.0
  %67 = vmatpush1.msra.mxu0 0.0
  %68 = vmatprep.subr.mxu0 0.0
  %69 = vmatpush1.msra.mxu0 0.0
  %70 = vmatprep.subr.mxu0 0.0
  %71 = vmatpush1.msra.mxu0 0.0
  %72 = vmatprep.subr.mxu0 0.0
  %73 = vmatpush1.msra.mxu0 0.0
  %74 = vmatprep.subr.mxu0 0.0
  %75 = vmatpush1.msra.mxu0 0.0
  %76 = vmatprep.subr.mxu0 0.0
  %77 = vmatpush1.msra.mxu0 0.0
  %78 = vmatprep.subr.mxu0 0.0
  %79 = vmatpush1.msra.mxu0 0.0
  %80 = vmatprep.subr.mxu0 0.0
  %81 = vmatpush1.msra.mxu0 0.0
  %82 = vmatprep.subr.mxu0 0.0
  %83 = vmatpush1.msra.mxu0 0.0
  %84 = vmatprep.subr.mxu0 0.0
  %85 = vmatpush1.msra.mxu0 0.0
  %86 = vmatprep.subr.mxu0 0.0
  %87 = vmatpush1.msra.mxu0 0.0
  %88 = vmatprep.subr.mxu0 0.0
  %89 = vmatpush1.msra.mxu0 0.0
  %90 = vmatprep.subr.mxu0 0.0
  %91 = vmatpush1.msra.mxu0 0.0
  %92 = vmatprep.subr.mxu0 0.0
  %93 = vmatpush1.msra.mxu0 0.0
  %94 = vmatprep.subr.mxu0 0.0
  %95 = vmatpush1.msra.mxu0 0.0
  %96 = vmatprep.subr.mxu0 0.0
  %97 = vmatpush1.msra.mxu0 0.0
  %98 = vmatprep.subr.mxu0 0.0
  %99 = vmatpush1.msra.mxu0 0.0
  %100 = vmatprep.subr.mxu0 0.0
  %101 = vmatpush1.msra.mxu0 0.0
  %102 = vmatprep.subr.mxu0 0.0
  %103 = vmatpush1.msra.mxu0 0.0
  %104 = vmatprep.subr.mxu0 0.0
  %105 = vmatpush1.msra.mxu0 0.0
  %106 = vmatprep.subr.mxu0 0.0
  %107 = vmatpush1.msra.mxu0 0.0
  %108 = vmatprep.subr.mxu0 0.0
  %109 = vmatpush1.msra.mxu0 0.0
  %110 = vmatprep.subr.mxu0 0.0
  %111 = vmatpush1.msra.mxu0 0.0
  %112 = vmatprep.subr.mxu0 0.0
  %113 = vmatpush1.msra.mxu0 0.0
  %114 = vmatprep.subr.mxu0 0.0
  %115 = vmatpush1.msra.mxu0 0.0
  %116 = vmatprep.mubr.f32.mxu0 0.0
  %117 = vmatmul.mubr.f32.gmra.mrb[0].mxu0 %v50
  %v118 = vpop.f32.mrb[0].mxu0
  %v119 = vadd.f32 %v41, %v118
  %v120 = vpop.f32.mrb[0].mxu0
  %v121 = vadd.f32 %v45, %v120
  %122 = vdwg.mxu0
  %v123 = vmax.f32 %v121, 0.0
  %v124 = vand.u32 2147483647, %v121
  %v125 = vsub.f32 0.0, %v124
  %v126 = vmul.f32 %v125, 1.442695
  %v127 = vpow.pop %v126
  %v128 = vadd.f32 %v127, 1.0
  %v129 = vlog2.pop %v128
  %v130 = vmul.f32 %v129, 0.6931472
  %v131 = vmul.f32 -0.5, %v127
  %v132 = vadd.f32 %v131, 1.0
  %v133 = vmul.f32 %v132, %v127
  %v134 = vand.u32 2147483647, %v127
  %vm135 = vcmp.lt.f32.partialorder %v134, 0.0004427343
  %v136 = vsel %vm135, %v133, %v130
  %v137 = vadd.f32 %v123, %v136
  %v138 = vadd.f32 %v137, 1.0
  %v140 = vcombine.high %v119, %v119
  %v142 = vunpack.c.l.s4 1966171168
  %v143 = vunpack.c.0.s8 %v142
  %v144 = vlaneseq
  %v145 = vshrl.u32 %v144, 7
  %v146 = vsub.s32 %v143, %v145
  %v147 = vrot.slane %v119, %v146
  %v149 = vunpack.c.l.s4 1966171168
  %v150 = vunpack.c.0.s8 %v149
  %v151 = vlaneseq
  %v152 = vshrl.u32 %v151, 7
  %v153 = vsub.s32 %v150, %v152
  %v154 = vrot.slane %v140, %v153
  %v155 = vcombine.high %v147, %v147
  %v156 = vcombine.high %v154, %v154
  %v158 = vunpack.c.l.s4 1966171168
  %v159 = vunpack.c.0.s8 %v158
  %v160 = vlaneseq
  %v161 = vshrl.u32 %v160, 7
  %v162 = vsub.s32 %v159, %v161
  %v163 = vrot.slane %v147, %v162
  %v165 = vunpack.c.l.s4 1966171168
  %v166 = vunpack.c.0.s8 %v165
  %v167 = vlaneseq
  %v168 = vshrl.u32 %v167, 7
  %v169 = vsub.s32 %v166, %v168
  %v170 = vrot.slane %v154, %v169
  %v172 = vunpack.c.l.s4 1966171168
  %v173 = vunpack.c.0.s8 %v172
  %v174 = vlaneseq
  %v175 = vshrl.u32 %v174, 7
  %v176 = vsub.s32 %v173, %v175
  %v177 = vrot.slane %v155, %v176
  %v179 = vunpack.c.l.s4 1966171168
  %v180 = vunpack.c.0.s8 %v179
  %v181 = vlaneseq
  %v182 = vshrl.u32 %v181, 7
  %v183 = vsub.s32 %v180, %v182
  %v184 = vrot.slane %v156, %v183
  %v185 = vcombine.high %v163, %v163
  %v186 = vcombine.high %v170, %v170
  %v187 = vcombine.high %v177, %v177
  %v188 = vcombine.high %v184, %v184
  %v189 = vlaneseq
  %v190 = vshrl.u32 %v189, 7
  %v191 = vsub.s32 0, %v190
  %v192 = vrot.slane %v163, %v191
  %v193 = vlaneseq
  %v194 = vshrl.u32 %v193, 7
  %v195 = vsub.s32 0, %v194
  %v196 = vrot.slane %v177, %v195
  %v197 = vlaneseq
  %v198 = vshrl.u32 %v197, 7
  %v199 = vsub.s32 0, %v198
  %v200 = vrot.slane %v185, %v199
  %v201 = vlaneseq
  %v202 = vshrl.u32 %v201, 7
  %v203 = vsub.s32 0, %v202
  %v204 = vrot.slane %v187, %v203
  %v205 = vlaneseq
  %v206 = vshrl.u32 %v205, 7
  %v207 = vsub.s32 0, %v206
  %v208 = vrot.slane %v170, %v207
  %v209 = vlaneseq
  %v210 = vshrl.u32 %v209, 7
  %v211 = vsub.s32 0, %v210
  %v212 = vrot.slane %v184, %v211
  %v213 = vlaneseq
  %v214 = vshrl.u32 %v213, 7
  %v215 = vsub.s32 0, %v214
  %v216 = vrot.slane %v186, %v215
  %v217 = vlaneseq
  %v218 = vshrl.u32 %v217, 7
  %v219 = vsub.s32 0, %v218
  %v220 = vrot.slane %v188, %v219
  %v229 = vmul.f32 %v20, %v192
  %v230 = vmul.f32 %v21, %v196
  %v231 = vmul.f32 %v22, %v200
  %v232 = vmul.f32 %v23, %v204
  %v233 = vmul.f32 %v24, %v208
  %v234 = vmul.f32 %v25, %v212
  %v235 = vmul.f32 %v26, %v216
  %v236 = vmul.f32 %v27, %v220
  %v237 = vsel %vm48, %v229, 0.0
  %238 = vadd.xlane.f32.xlu0 %v237
  %v239 = vpop.xlane.xlu0 %238
  %v240 = vsel %vm48, %v230, 0.0
  %241 = vadd.xlane.f32.xlu0 %v240
  %v242 = vpop.xlane.xlu0 %241
  %v243 = vsel %vm48, %v231, 0.0
  %244 = vadd.xlane.f32.xlu0 %v243
  %v245 = vpop.xlane.xlu0 %244
  %v246 = vsel %vm48, %v232, 0.0
  %247 = vadd.xlane.f32.xlu0 %v246
  %v248 = vpop.xlane.xlu0 %247
  %v249 = vsel %vm48, %v233, 0.0
  %250 = vadd.xlane.f32.xlu0 %v249
  %v251 = vpop.xlane.xlu0 %250
  %v252 = vsel %vm48, %v234, 0.0
  %253 = vadd.xlane.f32.xlu0 %v252
  %v254 = vpop.xlane.xlu0 %253
  %v255 = vsel %vm48, %v235, 0.0
  %256 = vadd.xlane.f32.xlu0 %v255
  %v257 = vpop.xlane.xlu0 %256
  %v258 = vsel %vm48, %v236, 0.0
  %259 = vadd.xlane.f32.xlu0 %v258
  %v260 = vpop.xlane.xlu0 %259
  %v261 = vmul.f32 %v20, %v20
  %v262 = vmul.f32 %v21, %v21
  %v263 = vmul.f32 %v22, %v22
  %v264 = vmul.f32 %v23, %v23
  %v265 = vmul.f32 %v24, %v24
  %v266 = vmul.f32 %v25, %v25
  %v267 = vmul.f32 %v26, %v26
  %v268 = vmul.f32 %v27, %v27
  %v269 = vsel %vm48, %v261, 0.0
  %270 = vadd.xlane.f32.xlu0 %v269
  %v271 = vpop.xlane.xlu0 %270
  %v272 = vsel %vm48, %v262, 0.0
  %273 = vadd.xlane.f32.xlu0 %v272
  %v274 = vpop.xlane.xlu0 %273
  %v275 = vsel %vm48, %v263, 0.0
  %276 = vadd.xlane.f32.xlu0 %v275
  %v277 = vpop.xlane.xlu0 %276
  %v278 = vsel %vm48, %v264, 0.0
  %279 = vadd.xlane.f32.xlu0 %v278
  %v280 = vpop.xlane.xlu0 %279
  %v281 = vsel %vm48, %v265, 0.0
  %282 = vadd.xlane.f32.xlu0 %v281
  %v283 = vpop.xlane.xlu0 %282
  %v284 = vsel %vm48, %v266, 0.0
  %285 = vadd.xlane.f32.xlu0 %v284
  %v286 = vpop.xlane.xlu0 %285
  %v287 = vsel %vm48, %v267, 0.0
  %288 = vadd.xlane.f32.xlu0 %v287
  %v289 = vpop.xlane.xlu0 %288
  %v290 = vsel %vm48, %v268, 0.0
  %291 = vadd.xlane.f32.xlu0 %v290
  %v292 = vpop.xlane.xlu0 %291
  %v293 = vrsqrt.pop %v271
  %v294 = vmul.f32 %v271, %v293
  %vm295 = vcmp.eq.f32.partialorder %v271, inf
  %v296 = vsel %vm295, %v271, %v294
  %vm297 = vcmp.eq.f32.partialorder %v271, 0.0
  %v298 = vand.u32 %v271, 2147483648
  %v299 = vsel %vm297, %v298, %v296
  %v300 = vrsqrt.pop %v274
  %v301 = vmul.f32 %v274, %v300
  %vm302 = vcmp.eq.f32.partialorder %v274, inf
  %v303 = vsel %vm302, %v274, %v301
  %vm304 = vcmp.eq.f32.partialorder %v274, 0.0
  %v305 = vand.u32 %v274, 2147483648
  %v306 = vsel %vm304, %v305, %v303
  %v307 = vrsqrt.pop %v277
  %v308 = vmul.f32 %v277, %v307
  %vm309 = vcmp.eq.f32.partialorder %v277, inf
  %v310 = vsel %vm309, %v277, %v308
  %vm311 = vcmp.eq.f32.partialorder %v277, 0.0
  %v312 = vand.u32 %v277, 2147483648
  %v313 = vsel %vm311, %v312, %v310
  %v314 = vrsqrt.pop %v280
  %v315 = vmul.f32 %v280, %v314
  %vm316 = vcmp.eq.f32.partialorder %v280, inf
  %v317 = vsel %vm316, %v280, %v315
  %vm318 = vcmp.eq.f32.partialorder %v280, 0.0
  %v319 = vand.u32 %v280, 2147483648
  %v320 = vsel %vm318, %v319, %v317
  %v321 = vrsqrt.pop %v283
  %v322 = vmul.f32 %v283, %v321
  %vm323 = vcmp.eq.f32.partialorder %v283, inf
  %v324 = vsel %vm323, %v283, %v322
  %vm325 = vcmp.eq.f32.partialorder %v283, 0.0
  %v326 = vand.u32 %v283, 2147483648
  %v327 = vsel %vm325, %v326, %v324
  %v328 = vrsqrt.pop %v286
  %v329 = vmul.f32 %v286, %v328
  %vm330 = vcmp.eq.f32.partialorder %v286, inf
  %v331 = vsel %vm330, %v286, %v329
  %vm332 = vcmp.eq.f32.partialorder %v286, 0.0
  %v333 = vand.u32 %v286, 2147483648
  %v334 = vsel %vm332, %v333, %v331
  %v335 = vrsqrt.pop %v289
  %v336 = vmul.f32 %v289, %v335
  %vm337 = vcmp.eq.f32.partialorder %v289, inf
  %v338 = vsel %vm337, %v289, %v336
  %vm339 = vcmp.eq.f32.partialorder %v289, 0.0
  %v340 = vand.u32 %v289, 2147483648
  %v341 = vsel %vm339, %v340, %v338
  %v342 = vrsqrt.pop %v292
  %v343 = vmul.f32 %v292, %v342
  %vm344 = vcmp.eq.f32.partialorder %v292, inf
  %v345 = vsel %vm344, %v292, %v343
  %vm346 = vcmp.eq.f32.partialorder %v292, 0.0
  %v347 = vand.u32 %v292, 2147483648
  %v348 = vsel %vm346, %v347, %v345
  %v349 = vmul.f32 %v119, %v119
  %v350 = vsel %vm48, %v349, 0.0
  %351 = vadd.xlane.f32.xlu0 %v350
  %v352 = vpop.xlane.xlu0 %351
  %v353 = vrsqrt.pop %v352
  %v354 = vmul.f32 %v352, %v353
  %vm355 = vcmp.eq.f32.partialorder %v352, inf
  %v356 = vsel %vm355, %v352, %v354
  %vm357 = vcmp.eq.f32.partialorder %v352, 0.0
  %v358 = vand.u32 %v352, 2147483648
  %v359 = vsel %vm357, %v358, %v356
  %v360 = vmax.f32 %v299, 1e-08
  %v361 = vmax.f32 %v306, 1e-08
  %v362 = vmax.f32 %v313, 1e-08
  %v363 = vmax.f32 %v320, 1e-08
  %v364 = vmax.f32 %v327, 1e-08
  %v365 = vmax.f32 %v334, 1e-08
  %v366 = vmax.f32 %v341, 1e-08
  %v367 = vmax.f32 %v348, 1e-08
  %v368 = vmax.f32 %v359, 1e-08
  %v370 = vlaneseq
  %v371 = vshrl.u32 %v370, 7
  %v372 = vsub.s32 0, %v371
  %v373 = vrot.slane %v368, %v372
  %v374 = vlaneseq
  %v375 = vshrl.u32 %v374, 7
  %v376 = vsub.s32 1, %v375
  %v377 = vrot.slane %v368, %v376
  %v378 = vlaneseq
  %v379 = vshrl.u32 %v378, 7
  %v380 = vsub.s32 2, %v379
  %v381 = vrot.slane %v368, %v380
  %v382 = vlaneseq
  %v383 = vshrl.u32 %v382, 7
  %v384 = vsub.s32 3, %v383
  %v385 = vrot.slane %v368, %v384
  %v386 = vlaneseq
  %v387 = vshrl.u32 %v386, 7
  %v388 = vsub.s32 4, %v387
  %v389 = vrot.slane %v368, %v388
  %v390 = vlaneseq
  %v391 = vshrl.u32 %v390, 7
  %v392 = vsub.s32 5, %v391
  %v393 = vrot.slane %v368, %v392
  %v394 = vlaneseq
  %v395 = vshrl.u32 %v394, 7
  %v396 = vsub.s32 6, %v395
  %v397 = vrot.slane %v368, %v396
  %v398 = vlaneseq
  %v399 = vshrl.u32 %v398, 7
  %v400 = vsub.s32 7, %v399
  %v401 = vrot.slane %v368, %v400
  %v410 = vmul.f32 %v360, %v373
  %v411 = vmul.f32 %v361, %v377
  %v412 = vmul.f32 %v362, %v381
  %v413 = vmul.f32 %v363, %v385
  %v414 = vmul.f32 %v364, %v389
  %v415 = vmul.f32 %v365, %v393
  %v416 = vmul.f32 %v366, %v397
  %v417 = vmul.f32 %v367, %v401
  %v418 = vrcp.pop %v410
  %v419 = vmul.f32 %v239, %v418
  %v420 = vrcp.pop %v411
  %v421 = vmul.f32 %v242, %v420
  %v422 = vrcp.pop %v412
  %v423 = vmul.f32 %v245, %v422
  %v424 = vrcp.pop %v413
  %v425 = vmul.f32 %v248, %v424
  %v426 = vrcp.pop %v414
  %v427 = vmul.f32 %v251, %v426
  %v428 = vrcp.pop %v415
  %v429 = vmul.f32 %v254, %v428
  %v430 = vrcp.pop %v416
  %v431 = vmul.f32 %v257, %v430
  %v432 = vrcp.pop %v417
  %v433 = vmul.f32 %v260, %v432
  %435 = vset.pattern.permute.xlu0 0
  %436 = vperm.xlu0 %435, %v138
  %v437 = vpop.permute.xlu0 %436
  %v438 = vlaneseq
  %v439 = vshrl.u32 %v438, 7
  %v440 = vsub.s32 0, %v439
  %v441 = vrot.slane %v437, %v440
  %v442 = vlaneseq
  %v443 = vshrl.u32 %v442, 7
  %v444 = vsub.s32 1, %v443
  %v445 = vrot.slane %v437, %v444
  %v446 = vlaneseq
  %v447 = vshrl.u32 %v446, 7
  %v448 = vsub.s32 2, %v447
  %v449 = vrot.slane %v437, %v448
  %v450 = vlaneseq
  %v451 = vshrl.u32 %v450, 7
  %v452 = vsub.s32 3, %v451
  %v453 = vrot.slane %v437, %v452
  %v454 = vlaneseq
  %v455 = vshrl.u32 %v454, 7
  %v456 = vsub.s32 4, %v455
  %v457 = vrot.slane %v437, %v456
  %v458 = vlaneseq
  %v459 = vshrl.u32 %v458, 7
  %v460 = vsub.s32 5, %v459
  %v461 = vrot.slane %v437, %v460
  %v462 = vlaneseq
  %v463 = vshrl.u32 %v462, 7
  %v464 = vsub.s32 6, %v463
  %v465 = vrot.slane %v437, %v464
  %v466 = vlaneseq
  %v467 = vshrl.u32 %v466, 7
  %v468 = vsub.s32 7, %v467
  %v469 = vrot.slane %v437, %v468
  %v478 = vmul.f32 %v419, %v441
  %v479 = vmul.f32 %v421, %v445
  %v480 = vmul.f32 %v423, %v449
  %v481 = vmul.f32 %v425, %v453
  %v482 = vmul.f32 %v427, %v457
  %v483 = vmul.f32 %v429, %v461
  %v484 = vmul.f32 %v431, %v465
  %v485 = vmul.f32 %v433, %v469
  %494 = vset.pattern.permute.xlu0 0
  %495 = vperm.xlu0 %494, %v478
  %v496 = vpop.permute.xlu0 %495
  %497 = vset.pattern.permute.xlu0 0
  %498 = vperm.xlu0 %497, %v479
  %v499 = vpop.permute.xlu0 %498
  %500 = vset.pattern.permute.xlu0 0
  %501 = vperm.xlu0 %500, %v480
  %v502 = vpop.permute.xlu0 %501
  %503 = vset.pattern.permute.xlu0 0
  %504 = vperm.xlu0 %503, %v481
  %v505 = vpop.permute.xlu0 %504
  %506 = vset.pattern.permute.xlu0 0
  %507 = vperm.xlu0 %506, %v482
  %v508 = vpop.permute.xlu0 %507
  %509 = vset.pattern.permute.xlu0 0
  %510 = vperm.xlu0 %509, %v483
  %v511 = vpop.permute.xlu0 %510
  %512 = vset.pattern.permute.xlu0 0
  %513 = vperm.xlu0 %512, %v484
  %v514 = vpop.permute.xlu0 %513
  %515 = vset.pattern.permute.xlu0 0
  %516 = vperm.xlu0 %515, %v485
  %v517 = vpop.permute.xlu0 %516
  %v518 = vlaneseq
  %v519 = vand.u32 %v518, 127
  %v520 = vlaneseq
  %v521 = vshrl.u32 %v520, 7
  %v522 = vsub.s32 %v519, %v521
  %v523 = vrot.slane %v496, %v522
  %v524 = vlaneseq
  %v525 = vshrl.u32 %v524, 7
  %v526 = vsub.s32 %v519, %v525
  %v527 = vrot.slane %v499, %v526
  %v528 = vlaneseq
  %v529 = vshrl.u32 %v528, 7
  %v530 = vsub.s32 %v519, %v529
  %v531 = vrot.slane %v502, %v530
  %v532 = vlaneseq
  %v533 = vshrl.u32 %v532, 7
  %v534 = vsub.s32 %v519, %v533
  %v535 = vrot.slane %v505, %v534
  %v536 = vlaneseq
  %v537 = vshrl.u32 %v536, 7
  %v538 = vsub.s32 %v519, %v537
  %v539 = vrot.slane %v508, %v538
  %v540 = vlaneseq
  %v541 = vshrl.u32 %v540, 7
  %v542 = vsub.s32 %v519, %v541
  %v543 = vrot.slane %v511, %v542
  %v544 = vlaneseq
  %v545 = vshrl.u32 %v544, 7
  %v546 = vsub.s32 %v519, %v545
  %v547 = vrot.slane %v514, %v546
  %v548 = vlaneseq
  %v549 = vshrl.u32 %v548, 7
  %v550 = vsub.s32 %v519, %v549
  %v551 = vrot.slane %v517, %v550
  %vm552 = vcmask 1041409
  %v553 = vsel %vm552, %v527, %v523
  %vm554 = vcmask 1042434
  %v555 = vsel %vm554, %v531, %v553
  %vm556 = vcmask 1043459
  %v557 = vsel %vm556, %v535, %v555
  %vm558 = vcmask 1044484
  %v559 = vsel %vm558, %v539, %v557
  %vm560 = vcmask 1045509
  %v561 = vsel %vm560, %v543, %v559
  %vm562 = vcmask 1046534
  %v563 = vsel %vm562, %v547, %v561
  %vm564 = vcmask 1047559
  %v565 = vsel %vm564, %v551, %v563
  %vm567 = vcmask 64512
  %v568 = vsel %vm567, %v565, -inf
  %569 = vmax.xlane.f32.xlu0 %v568
  %v570 = vpop.xlane.xlu0 %569
  %v572 = vlaneseq
  %v573 = vshrl.u32 %v572, 7
  %v574 = vsub.s32 0, %v573
  %v575 = vrot.slane %v570, %v574
  %v576 = vlaneseq
  %v577 = vshrl.u32 %v576, 7
  %v578 = vsub.s32 1, %v577
  %v579 = vrot.slane %v570, %v578
  %v580 = vlaneseq
  %v581 = vshrl.u32 %v580, 7
  %v582 = vsub.s32 2, %v581
  %v583 = vrot.slane %v570, %v582
  %v584 = vlaneseq
  %v585 = vshrl.u32 %v584, 7
  %v586 = vsub.s32 3, %v585
  %v587 = vrot.slane %v570, %v586
  %v588 = vlaneseq
  %v589 = vshrl.u32 %v588, 7
  %v590 = vsub.s32 4, %v589
  %v591 = vrot.slane %v570, %v590
  %v592 = vlaneseq
  %v593 = vshrl.u32 %v592, 7
  %v594 = vsub.s32 5, %v593
  %v595 = vrot.slane %v570, %v594
  %v596 = vlaneseq
  %v597 = vshrl.u32 %v596, 7
  %v598 = vsub.s32 6, %v597
  %v599 = vrot.slane %v570, %v598
  %v600 = vlaneseq
  %v601 = vshrl.u32 %v600, 7
  %v602 = vsub.s32 7, %v601
  %v603 = vrot.slane %v570, %v602
  %v612 = vsub.f32 %v478, %v575
  %v613 = vsub.f32 %v479, %v579
  %v614 = vsub.f32 %v480, %v583
  %v615 = vsub.f32 %v481, %v587
  %v616 = vsub.f32 %v482, %v591
  %v617 = vsub.f32 %v483, %v595
  %v618 = vsub.f32 %v484, %v599
  %v619 = vsub.f32 %v485, %v603
  %v620 = vmul.f32 %v612, 1.442695
  %v621 = vpow.pop %v620
  %v622 = vmul.f32 %v613, 1.442695
  %v623 = vpow.pop %v622
  %v624 = vmul.f32 %v614, 1.442695
  %v625 = vpow.pop %v624
  %v626 = vmul.f32 %v615, 1.442695
  %v627 = vpow.pop %v626
  %v628 = vmul.f32 %v616, 1.442695
  %v629 = vpow.pop %v628
  %v630 = vmul.f32 %v617, 1.442695
  %v631 = vpow.pop %v630
  %v632 = vmul.f32 %v618, 1.442695
  %v633 = vpow.pop %v632
  %v634 = vmul.f32 %v619, 1.442695
  %v635 = vpow.pop %v634
  %644 = vset.pattern.permute.xlu0 0
  %645 = vperm.xlu0 %644, %v621
  %v646 = vpop.permute.xlu0 %645
  %647 = vset.pattern.permute.xlu0 0
  %648 = vperm.xlu0 %647, %v623
  %v649 = vpop.permute.xlu0 %648
  %650 = vset.pattern.permute.xlu0 0
  %651 = vperm.xlu0 %650, %v625
  %v652 = vpop.permute.xlu0 %651
  %653 = vset.pattern.permute.xlu0 0
  %654 = vperm.xlu0 %653, %v627
  %v655 = vpop.permute.xlu0 %654
  %656 = vset.pattern.permute.xlu0 0
  %657 = vperm.xlu0 %656, %v629
  %v658 = vpop.permute.xlu0 %657
  %659 = vset.pattern.permute.xlu0 0
  %660 = vperm.xlu0 %659, %v631
  %v661 = vpop.permute.xlu0 %660
  %662 = vset.pattern.permute.xlu0 0
  %663 = vperm.xlu0 %662, %v633
  %v664 = vpop.permute.xlu0 %663
  %665 = vset.pattern.permute.xlu0 0
  %666 = vperm.xlu0 %665, %v635
  %v667 = vpop.permute.xlu0 %666
  %v668 = vlaneseq
  %v669 = vshrl.u32 %v668, 7
  %v670 = vsub.s32 %v519, %v669
  %v671 = vrot.slane %v646, %v670
  %v672 = vlaneseq
  %v673 = vshrl.u32 %v672, 7
  %v674 = vsub.s32 %v519, %v673
  %v675 = vrot.slane %v649, %v674
  %v676 = vlaneseq
  %v677 = vshrl.u32 %v676, 7
  %v678 = vsub.s32 %v519, %v677
  %v679 = vrot.slane %v652, %v678
  %v680 = vlaneseq
  %v681 = vshrl.u32 %v680, 7
  %v682 = vsub.s32 %v519, %v681
  %v683 = vrot.slane %v655, %v682
  %v684 = vlaneseq
  %v685 = vshrl.u32 %v684, 7
  %v686 = vsub.s32 %v519, %v685
  %v687 = vrot.slane %v658, %v686
  %v688 = vlaneseq
  %v689 = vshrl.u32 %v688, 7
  %v690 = vsub.s32 %v519, %v689
  %v691 = vrot.slane %v661, %v690
  %v692 = vlaneseq
  %v693 = vshrl.u32 %v692, 7
  %v694 = vsub.s32 %v519, %v693
  %v695 = vrot.slane %v664, %v694
  %v696 = vlaneseq
  %v697 = vshrl.u32 %v696, 7
  %v698 = vsub.s32 %v519, %v697
  %v699 = vrot.slane %v667, %v698
  %v700 = vsel %vm552, %v675, %v671
  %v701 = vsel %vm554, %v679, %v700
  %v702 = vsel %vm556, %v683, %v701
  %v703 = vsel %vm558, %v687, %v702
  %v704 = vsel %vm560, %v691, %v703
  %v705 = vsel %vm562, %v695, %v704
  %v706 = vsel %vm564, %v699, %v705
  %v708 = vsel %vm567, %v706, 0.0
  %709 = vadd.xlane.f32.xlu0 %v708
  %v710 = vpop.xlane.xlu0 %709
  %v712 = vlaneseq
  %v713 = vshrl.u32 %v712, 7
  %v714 = vsub.s32 0, %v713
  %v715 = vrot.slane %v710, %v714
  %v716 = vlaneseq
  %v717 = vshrl.u32 %v716, 7
  %v718 = vsub.s32 1, %v717
  %v719 = vrot.slane %v710, %v718
  %v720 = vlaneseq
  %v721 = vshrl.u32 %v720, 7
  %v722 = vsub.s32 2, %v721
  %v723 = vrot.slane %v710, %v722
  %v724 = vlaneseq
  %v725 = vshrl.u32 %v724, 7
  %v726 = vsub.s32 3, %v725
  %v727 = vrot.slane %v710, %v726
  %v728 = vlaneseq
  %v729 = vshrl.u32 %v728, 7
  %v730 = vsub.s32 4, %v729
  %v731 = vrot.slane %v710, %v730
  %v732 = vlaneseq
  %v733 = vshrl.u32 %v732, 7
  %v734 = vsub.s32 5, %v733
  %v735 = vrot.slane %v710, %v734
  %v736 = vlaneseq
  %v737 = vshrl.u32 %v736, 7
  %v738 = vsub.s32 6, %v737
  %v739 = vrot.slane %v710, %v738
  %v740 = vlaneseq
  %v741 = vshrl.u32 %v740, 7
  %v742 = vsub.s32 7, %v741
  %v743 = vrot.slane %v710, %v742
  %v752 = vrcp.pop %v715
  %v753 = vmul.f32 %v621, %v752
  %v754 = vrcp.pop %v719
  %v755 = vmul.f32 %v623, %v754
  %v756 = vrcp.pop %v723
  %v757 = vmul.f32 %v625, %v756
  %v758 = vrcp.pop %v727
  %v759 = vmul.f32 %v627, %v758
  %v760 = vrcp.pop %v731
  %v761 = vmul.f32 %v629, %v760
  %v762 = vrcp.pop %v735
  %v763 = vmul.f32 %v631, %v762
  %v764 = vrcp.pop %v739
  %v765 = vmul.f32 %v633, %v764
  %v766 = vrcp.pop %v743
  %v767 = vmul.f32 %v635, %v766
  %769 = vset.pattern.permute.xlu0 0
  %770 = vperm.xlu0 %769, %v753
  %v771 = vpop.permute.xlu0 %770
  %774 = vset.pattern.permute.xlu0 0
  %775 = vperm.xlu0 %774, %v755
  %v776 = vpop.permute.xlu0 %775
  %779 = vset.pattern.permute.xlu0 0
  %780 = vperm.xlu0 %779, %v757
  %v781 = vpop.permute.xlu0 %780
  %784 = vset.pattern.permute.xlu0 0
  %785 = vperm.xlu0 %784, %v759
  %v786 = vpop.permute.xlu0 %785
  %789 = vset.pattern.permute.xlu0 0
  %790 = vperm.xlu0 %789, %v761
  %v791 = vpop.permute.xlu0 %790
  %794 = vset.pattern.permute.xlu0 0
  %795 = vperm.xlu0 %794, %v763
  %v796 = vpop.permute.xlu0 %795
  %799 = vset.pattern.permute.xlu0 0
  %800 = vperm.xlu0 %799, %v765
  %v801 = vpop.permute.xlu0 %800
  %804 = vset.pattern.permute.xlu0 0
  %805 = vperm.xlu0 %804, %v767
  %v806 = vpop.permute.xlu0 %805
  %v808 = vmul.f32 %v771, %v20
  %v809 = vmul.f32 %v776, %v21
  %v810 = vmul.f32 %v781, %v22
  %v811 = vmul.f32 %v786, %v23
  %v812 = vmul.f32 %v791, %v24
  %v813 = vmul.f32 %v796, %v25
  %v814 = vmul.f32 %v801, %v26
  %v815 = vmul.f32 %v806, %v27
  %v816 = vsel %vm48, %v808, 0.0
  %v817 = vrot.slane %v816, 4
  %v818 = vadd.f32 %v816, %v817
  %v819 = vrot.slane %v818, 2
  %v820 = vadd.f32 %v818, %v819
  %v821 = vrot.slane %v820, 1
  %v822 = vadd.f32 %v820, %v821
  %v823 = vsel %vm48, %v809, 0.0
  %v824 = vrot.slane %v823, 4
  %v825 = vadd.f32 %v823, %v824
  %v826 = vrot.slane %v825, 2
  %v827 = vadd.f32 %v825, %v826
  %v828 = vrot.slane %v827, 1
  %v829 = vadd.f32 %v827, %v828
  %v830 = vsel %vm48, %v810, 0.0
  %v831 = vrot.slane %v830, 4
  %v832 = vadd.f32 %v830, %v831
  %v833 = vrot.slane %v832, 2
  %v834 = vadd.f32 %v832, %v833
  %v835 = vrot.slane %v834, 1
  %v836 = vadd.f32 %v834, %v835
  %v837 = vsel %vm48, %v811, 0.0
  %v838 = vrot.slane %v837, 4
  %v839 = vadd.f32 %v837, %v838
  %v840 = vrot.slane %v839, 2
  %v841 = vadd.f32 %v839, %v840
  %v842 = vrot.slane %v841, 1
  %v843 = vadd.f32 %v841, %v842
  %v844 = vsel %vm48, %v812, 0.0
  %v845 = vrot.slane %v844, 4
  %v846 = vadd.f32 %v844, %v845
  %v847 = vrot.slane %v846, 2
  %v848 = vadd.f32 %v846, %v847
  %v849 = vrot.slane %v848, 1
  %v850 = vadd.f32 %v848, %v849
  %v851 = vsel %vm48, %v813, 0.0
  %v852 = vrot.slane %v851, 4
  %v853 = vadd.f32 %v851, %v852
  %v854 = vrot.slane %v853, 2
  %v855 = vadd.f32 %v853, %v854
  %v856 = vrot.slane %v855, 1
  %v857 = vadd.f32 %v855, %v856
  %v858 = vsel %vm48, %v814, 0.0
  %v859 = vrot.slane %v858, 4
  %v860 = vadd.f32 %v858, %v859
  %v861 = vrot.slane %v860, 2
  %v862 = vadd.f32 %v860, %v861
  %v863 = vrot.slane %v862, 1
  %v864 = vadd.f32 %v862, %v863
  %v865 = vsel %vm48, %v815, 0.0
  %v866 = vrot.slane %v865, 4
  %v867 = vadd.f32 %v865, %v866
  %v868 = vrot.slane %v867, 2
  %v869 = vadd.f32 %v867, %v868
  %v870 = vrot.slane %v869, 1
  %v871 = vadd.f32 %v869, %v870
  %v872 = vld [vmem:[%s2 + $0x40] sm:$0xff]
  %v873 = vld [vmem:[%s2 + $0x48] sm:$0xff]
  %v874 = vld [vmem:[%s2 + $0x50] sm:$0xff]
  %v875 = vld [vmem:[%s2 + $0x58] sm:$0xff]
  %v876 = vld [vmem:[%s2 + $0x60] sm:$0xff]
  %v877 = vld [vmem:[%s2 + $0x68] sm:$0xff]
  %v878 = vld [vmem:[%s2 + $0x70] sm:$0xff]
  %v879 = vld [vmem:[%s2 + $0x78] sm:$0xff]
  %s880 = scalar_lea.vmem %s3, 1
  %v881 = vld [vmem:[%s880] ss:$8 sm:$0x3]
  %v883 = vlaneseq
  %v884 = vshrl.u32 %v883, 7
  %v885 = vsub.s32 0, %v884
  %v886 = vrot.slane %v881, %v885
  %v896 = vsel %vm552, %v829, %v822
  %v897 = vsel %vm554, %v836, %v896
  %v898 = vsel %vm556, %v843, %v897
  %v899 = vsel %vm558, %v850, %v898
  %v900 = vsel %vm560, %v857, %v899
  %v901 = vsel %vm562, %v864, %v900
  %v902 = vsel %vm564, %v871, %v901
  %v903 = vsel %vm48, %v902, 0
  %905 = vmatprep.subr.mxu0 %v873
  %906 = vmatpush1.msra.mxu0 %v872
  %907 = vmatprep.subr.mxu0 %v875
  %908 = vmatpush1.msra.mxu0 %v874
  %909 = vmatprep.subr.mxu0 %v877
  %910 = vmatpush1.msra.mxu0 %v876
  %911 = vmatprep.subr.mxu0 %v879
  %912 = vmatpush1.msra.mxu0 %v878
  %913 = vmatprep.subr.mxu0 0.0
  %914 = vmatpush1.msra.mxu0 0.0
  %915 = vmatprep.subr.mxu0 0.0
  %916 = vmatpush1.msra.mxu0 0.0
  %917 = vmatprep.subr.mxu0 0.0
  %918 = vmatpush1.msra.mxu0 0.0
  %919 = vmatprep.subr.mxu0 0.0
  %920 = vmatpush1.msra.mxu0 0.0
  %921 = vmatprep.subr.mxu0 0.0
  %922 = vmatpush1.msra.mxu0 0.0
  %923 = vmatprep.subr.mxu0 0.0
  %924 = vmatpush1.msra.mxu0 0.0
  %925 = vmatprep.subr.mxu0 0.0
  %926 = vmatpush1.msra.mxu0 0.0
  %927 = vmatprep.subr.mxu0 0.0
  %928 = vmatpush1.msra.mxu0 0.0
  %929 = vmatprep.subr.mxu0 0.0
  %930 = vmatpush1.msra.mxu0 0.0
  %931 = vmatprep.subr.mxu0 0.0
  %932 = vmatpush1.msra.mxu0 0.0
  %933 = vmatprep.subr.mxu0 0.0
  %934 = vmatpush1.msra.mxu0 0.0
  %935 = vmatprep.subr.mxu0 0.0
  %936 = vmatpush1.msra.mxu0 0.0
  %937 = vmatprep.subr.mxu0 0.0
  %938 = vmatpush1.msra.mxu0 0.0
  %939 = vmatprep.subr.mxu0 0.0
  %940 = vmatpush1.msra.mxu0 0.0
  %941 = vmatprep.subr.mxu0 0.0
  %942 = vmatpush1.msra.mxu0 0.0
  %943 = vmatprep.subr.mxu0 0.0
  %944 = vmatpush1.msra.mxu0 0.0
  %945 = vmatprep.subr.mxu0 0.0
  %946 = vmatpush1.msra.mxu0 0.0
  %947 = vmatprep.subr.mxu0 0.0
  %948 = vmatpush1.msra.mxu0 0.0
  %949 = vmatprep.subr.mxu0 0.0
  %950 = vmatpush1.msra.mxu0 0.0
  %951 = vmatprep.subr.mxu0 0.0
  %952 = vmatpush1.msra.mxu0 0.0
  %953 = vmatprep.subr.mxu0 0.0
  %954 = vmatpush1.msra.mxu0 0.0
  %955 = vmatprep.subr.mxu0 0.0
  %956 = vmatpush1.msra.mxu0 0.0
  %957 = vmatprep.subr.mxu0 0.0
  %958 = vmatpush1.msra.mxu0 0.0
  %959 = vmatprep.subr.mxu0 0.0
  %960 = vmatpush1.msra.mxu0 0.0
  %961 = vmatprep.subr.mxu0 0.0
  %962 = vmatpush1.msra.mxu0 0.0
  %963 = vmatprep.subr.mxu0 0.0
  %964 = vmatpush1.msra.mxu0 0.0
  %965 = vmatprep.subr.mxu0 0.0
  %966 = vmatpush1.msra.mxu0 0.0
  %967 = vmatprep.subr.mxu0 0.0
  %968 = vmatpush1.msra.mxu0 0.0
  %969 = vmatprep.mubr.f32.mxu0 0.0
  %970 = vmatmul.mubr.f32.gmra.mrb[0].mxu0 %v903
  %v971 = vpop.f32.mrb[0].mxu0
  %v972 = vadd.f32 %v886, %v971
  %v973 = vpop.f32.mrb[0].mxu0
  %974 = vdwg.mxu0
  %975 = vrot.lane.b32.xlu0 %v119, 96
  %v976 = vpop.permute.xlu0 %975
  %v978 = vadd.f32 %v972, %v976
  %v979 = vxor.u32 %v978, 2147483648
  %v980 = vmul.f32 %v979, 1.442695
  %v981 = vpow.pop %v980
  %v982 = vadd.f32 %v981, 1.0
  %v983 = vrcp.pop %v982
  %v984 = vmul.f32 1.0, %v983
  %985 = vrot.lane.b32.xlu0 %v119, 32
  %v986 = vpop.permute.xlu0 %985
  %v988 = vmul.f32 %v984, %v986
  %990 = vrot.lane.b32.xlu0 %v988, 64
  %v991 = vpop.permute.xlu0 %990
  %v993 = vadd.f32 %v972, %v991
  %v994 = vtanh.pop %v993
  %v995 = vsub.f32 1.0, %v984
  %997 = vrot.lane.b32.xlu0 %v994, 96
  %v998 = vpop.permute.xlu0 %997
  %v1000 = vmul.f32 %v995, %v998
  %1001 = vrot.lane.b32.xlu0 %v19, 32
  %v1002 = vpop.permute.xlu0 %1001
  %v1004 = vmul.f32 %v984, %v1002
  %v1005 = vadd.f32 %v1000, %v1004
  %v1006 = vld [vmem:[%s2 + $0x80] sm:$0xff]
  %v1007 = vld [vmem:[%s2 + $0x88] sm:$0xff]
  %v1008 = vld [vmem:[%s2 + $0x90] sm:$0xff]
  %v1009 = vld [vmem:[%s2 + $0x98] sm:$0xff]
  %v1010 = vld [vmem:[%s2 + $0xa0] sm:$0xff]
  %v1011 = vld [vmem:[%s2 + $0xa8] sm:$0xff]
  %v1012 = vld [vmem:[%s2 + $0xb0] sm:$0xff]
  %v1013 = vld [vmem:[%s2 + $0xb8] sm:$0xff]
  %s1014 = scalar_lea.vmem %s3, 2
  %v1015 = vld [vmem:[%s1014] ss:$8 sm:$0x3]
  %v1017 = vlaneseq
  %v1018 = vshrl.u32 %v1017, 7
  %v1019 = vsub.s32 0, %v1018
  %v1020 = vrot.slane %v1015, %v1019
  %1023 = vrot.lane.b32.xlu0 %v1005, 96
  %v1024 = vpop.permute.xlu0 %1023
  %v1025 = vsel %vm48, %v1024, 0
  %1027 = vmatprep.subr.mxu0 %v1007
  %1028 = vmatpush1.msra.mxu0 %v1006
  %1029 = vmatprep.subr.mxu0 %v1009
  %1030 = vmatpush1.msra.mxu0 %v1008
  %1031 = vmatprep.subr.mxu0 %v1011
  %1032 = vmatpush1.msra.mxu0 %v1010
  %1033 = vmatprep.subr.mxu0 %v1013
  %1034 = vmatpush1.msra.mxu0 %v1012
  %1035 = vmatprep.subr.mxu0 0.0
  %1036 = vmatpush1.msra.mxu0 0.0
  %1037 = vmatprep.subr.mxu0 0.0
  %1038 = vmatpush1.msra.mxu0 0.0
  %1039 = vmatprep.subr.mxu0 0.0
  %1040 = vmatpush1.msra.mxu0 0.0
  %1041 = vmatprep.subr.mxu0 0.0
  %1042 = vmatpush1.msra.mxu0 0.0
  %1043 = vmatprep.subr.mxu0 0.0
  %1044 = vmatpush1.msra.mxu0 0.0
  %1045 = vmatprep.subr.mxu0 0.0
  %1046 = vmatpush1.msra.mxu0 0.0
  %1047 = vmatprep.subr.mxu0 0.0
  %1048 = vmatpush1.msra.mxu0 0.0
  %1049 = vmatprep.subr.mxu0 0.0
  %1050 = vmatpush1.msra.mxu0 0.0
  %1051 = vmatprep.subr.mxu0 0.0
  %1052 = vmatpush1.msra.mxu0 0.0
  %1053 = vmatprep.subr.mxu0 0.0
  %1054 = vmatpush1.msra.mxu0 0.0
  %1055 = vmatprep.subr.mxu0 0.0
  %1056 = vmatpush1.msra.mxu0 0.0
  %1057 = vmatprep.subr.mxu0 0.0
  %1058 = vmatpush1.msra.mxu0 0.0
  %1059 = vmatprep.subr.mxu0 0.0
  %1060 = vmatpush1.msra.mxu0 0.0
  %1061 = vmatprep.subr.mxu0 0.0
  %1062 = vmatpush1.msra.mxu0 0.0
  %1063 = vmatprep.subr.mxu0 0.0
  %1064 = vmatpush1.msra.mxu0 0.0
  %1065 = vmatprep.subr.mxu0 0.0
  %1066 = vmatpush1.msra.mxu0 0.0
  %1067 = vmatprep.subr.mxu0 0.0
  %1068 = vmatpush1.msra.mxu0 0.0
  %1069 = vmatprep.subr.mxu0 0.0
  %1070 = vmatpush1.msra.mxu0 0.0
  %1071 = vmatprep.subr.mxu0 0.0
  %1072 = vmatpush1.msra.mxu0 0.0
  %1073 = vmatprep.subr.mxu0 0.0
  %1074 = vmatpush1.msra.mxu0 0.0
  %1075 = vmatprep.subr.mxu0 0.0
  %1076 = vmatpush1.msra.mxu0 0.0
  %1077 = vmatprep.subr.mxu0 0.0
  %1078 = vmatpush1.msra.mxu0 0.0
  %1079 = vmatprep.subr.mxu0 0.0
  %1080 = vmatpush1.msra.mxu0 0.0
  %1081 = vmatprep.subr.mxu0 0.0
  %1082 = vmatpush1.msra.mxu0 0.0
  %1083 = vmatprep.subr.mxu0 0.0
  %1084 = vmatpush1.msra.mxu0 0.0
  %1085 = vmatprep.subr.mxu0 0.0
  %1086 = vmatpush1.msra.mxu0 0.0
  %1087 = vmatprep.subr.mxu0 0.0
  %1088 = vmatpush1.msra.mxu0 0.0
  %1089 = vmatprep.subr.mxu0 0.0
  %1090 = vmatpush1.msra.mxu0 0.0
  %1091 = vmatprep.mubr.f32.mxu0 0.0
  %1092 = vmatmul.mubr.f32.gmra.mrb[0].mxu0 %v1025
  %v1093 = vpop.f32.mrb[0].mxu0
  %v1094 = vadd.f32 %v1020, %v1093
  %v1095 = vpop.f32.mrb[0].mxu0
  %1096 = vdwg.mxu0
  %v1097 = vxor.u32 %v1094, 2147483648
  %v1098 = vmul.f32 %v1097, 1.442695
  %v1099 = vpow.pop %v1098
  %v1100 = vadd.f32 %v1099, 1.0
  %v1101 = vrcp.pop %v1100
  %v1102 = vmul.f32 1.0, %v1101
  %v1104 = vcombine.high %v1102, %v1102
  %v1106 = vunpack.c.l.s4 1966171168
  %v1107 = vunpack.c.0.s8 %v1106
  %v1108 = vlaneseq
  %v1109 = vshrl.u32 %v1108, 7
  %v1110 = vsub.s32 %v1107, %v1109
  %v1111 = vrot.slane %v1102, %v1110
  %v1113 = vunpack.c.l.s4 1966171168
  %v1114 = vunpack.c.0.s8 %v1113
  %v1115 = vlaneseq
  %v1116 = vshrl.u32 %v1115, 7
  %v1117 = vsub.s32 %v1114, %v1116
  %v1118 = vrot.slane %v1104, %v1117
  %v1119 = vcombine.high %v1111, %v1111
  %v1120 = vcombine.high %v1118, %v1118
  %v1122 = vunpack.c.l.s4 1966171168
  %v1123 = vunpack.c.0.s8 %v1122
  %v1124 = vlaneseq
  %v1125 = vshrl.u32 %v1124, 7
  %v1126 = vsub.s32 %v1123, %v1125
  %v1127 = vrot.slane %v1111, %v1126
  %v1129 = vunpack.c.l.s4 1966171168
  %v1130 = vunpack.c.0.s8 %v1129
  %v1131 = vlaneseq
  %v1132 = vshrl.u32 %v1131, 7
  %v1133 = vsub.s32 %v1130, %v1132
  %v1134 = vrot.slane %v1118, %v1133
  %v1136 = vunpack.c.l.s4 1966171168
  %v1137 = vunpack.c.0.s8 %v1136
  %v1138 = vlaneseq
  %v1139 = vshrl.u32 %v1138, 7
  %v1140 = vsub.s32 %v1137, %v1139
  %v1141 = vrot.slane %v1119, %v1140
  %v1143 = vunpack.c.l.s4 1966171168
  %v1144 = vunpack.c.0.s8 %v1143
  %v1145 = vlaneseq
  %v1146 = vshrl.u32 %v1145, 7
  %v1147 = vsub.s32 %v1144, %v1146
  %v1148 = vrot.slane %v1120, %v1147
  %v1149 = vcombine.high %v1127, %v1127
  %v1150 = vcombine.high %v1134, %v1134
  %v1151 = vcombine.high %v1141, %v1141
  %v1152 = vcombine.high %v1148, %v1148
  %v1153 = vlaneseq
  %v1154 = vshrl.u32 %v1153, 7
  %v1155 = vsub.s32 0, %v1154
  %v1156 = vrot.slane %v1127, %v1155
  %v1157 = vlaneseq
  %v1158 = vshrl.u32 %v1157, 7
  %v1159 = vsub.s32 0, %v1158
  %v1160 = vrot.slane %v1141, %v1159
  %v1161 = vlaneseq
  %v1162 = vshrl.u32 %v1161, 7
  %v1163 = vsub.s32 0, %v1162
  %v1164 = vrot.slane %v1149, %v1163
  %v1165 = vlaneseq
  %v1166 = vshrl.u32 %v1165, 7
  %v1167 = vsub.s32 0, %v1166
  %v1168 = vrot.slane %v1151, %v1167
  %v1169 = vlaneseq
  %v1170 = vshrl.u32 %v1169, 7
  %v1171 = vsub.s32 0, %v1170
  %v1172 = vrot.slane %v1134, %v1171
  %v1173 = vlaneseq
  %v1174 = vshrl.u32 %v1173, 7
  %v1175 = vsub.s32 0, %v1174
  %v1176 = vrot.slane %v1148, %v1175
  %v1177 = vlaneseq
  %v1178 = vshrl.u32 %v1177, 7
  %v1179 = vsub.s32 0, %v1178
  %v1180 = vrot.slane %v1150, %v1179
  %v1181 = vlaneseq
  %v1182 = vshrl.u32 %v1181, 7
  %v1183 = vsub.s32 0, %v1182
  %v1184 = vrot.slane %v1152, %v1183
  %v1193 = vmul.f32 %v771, %v1156
  %v1194 = vmul.f32 %v776, %v1160
  %v1195 = vmul.f32 %v781, %v1164
  %v1196 = vmul.f32 %v786, %v1168
  %v1197 = vmul.f32 %v791, %v1172
  %v1198 = vmul.f32 %v796, %v1176
  %v1199 = vmul.f32 %v801, %v1180
  %v1200 = vmul.f32 %v806, %v1184
  %v1201 = vsub.f32 1.0, %v1193
  %v1202 = vsub.f32 1.0, %v1194
  %v1203 = vsub.f32 1.0, %v1195
  %v1204 = vsub.f32 1.0, %v1196
  %v1205 = vsub.f32 1.0, %v1197
  %v1206 = vsub.f32 1.0, %v1198
  %v1207 = vsub.f32 1.0, %v1199
  %v1208 = vsub.f32 1.0, %v1200
  %v1209 = vmul.f32 %v20, %v1201
  %v1210 = vmul.f32 %v21, %v1202
  %v1211 = vmul.f32 %v22, %v1203
  %v1212 = vmul.f32 %v23, %v1204
  %v1213 = vmul.f32 %v24, %v1205
  %v1214 = vmul.f32 %v25, %v1206
  %v1215 = vmul.f32 %v26, %v1207
  %v1216 = vmul.f32 %v27, %v1208
  %v1218 = vcombine.high %v1094, %v1094
  %v1220 = vunpack.c.l.s4 1966171168
  %v1221 = vunpack.c.0.s8 %v1220
  %v1222 = vlaneseq
  %v1223 = vshrl.u32 %v1222, 7
  %v1224 = vsub.s32 %v1221, %v1223
  %v1225 = vrot.slane %v1094, %v1224
  %v1227 = vunpack.c.l.s4 1966171168
  %v1228 = vunpack.c.0.s8 %v1227
  %v1229 = vlaneseq
  %v1230 = vshrl.u32 %v1229, 7
  %v1231 = vsub.s32 %v1228, %v1230
  %v1232 = vrot.slane %v1218, %v1231
  %v1233 = vcombine.high %v1225, %v1225
  %v1234 = vcombine.high %v1232, %v1232
  %v1236 = vunpack.c.l.s4 1966171168
  %v1237 = vunpack.c.0.s8 %v1236
  %v1238 = vlaneseq
  %v1239 = vshrl.u32 %v1238, 7
  %v1240 = vsub.s32 %v1237, %v1239
  %v1241 = vrot.slane %v1225, %v1240
  %v1243 = vunpack.c.l.s4 1966171168
  %v1244 = vunpack.c.0.s8 %v1243
  %v1245 = vlaneseq
  %v1246 = vshrl.u32 %v1245, 7
  %v1247 = vsub.s32 %v1244, %v1246
  %v1248 = vrot.slane %v1232, %v1247
  %v1250 = vunpack.c.l.s4 1966171168
  %v1251 = vunpack.c.0.s8 %v1250
  %v1252 = vlaneseq
  %v1253 = vshrl.u32 %v1252, 7
  %v1254 = vsub.s32 %v1251, %v1253
  %v1255 = vrot.slane %v1233, %v1254
  %v1257 = vunpack.c.l.s4 1966171168
  %v1258 = vunpack.c.0.s8 %v1257
  %v1259 = vlaneseq
  %v1260 = vshrl.u32 %v1259, 7
  %v1261 = vsub.s32 %v1258, %v1260
  %v1262 = vrot.slane %v1234, %v1261
  %v1263 = vcombine.high %v1241, %v1241
  %v1264 = vcombine.high %v1248, %v1248
  %v1265 = vcombine.high %v1255, %v1255
  %v1266 = vcombine.high %v1262, %v1262
  %v1267 = vlaneseq
  %v1268 = vshrl.u32 %v1267, 7
  %v1269 = vsub.s32 0, %v1268
  %v1270 = vrot.slane %v1241, %v1269
  %v1271 = vlaneseq
  %v1272 = vshrl.u32 %v1271, 7
  %v1273 = vsub.s32 0, %v1272
  %v1274 = vrot.slane %v1255, %v1273
  %v1275 = vlaneseq
  %v1276 = vshrl.u32 %v1275, 7
  %v1277 = vsub.s32 0, %v1276
  %v1278 = vrot.slane %v1263, %v1277
  %v1279 = vlaneseq
  %v1280 = vshrl.u32 %v1279, 7
  %v1281 = vsub.s32 0, %v1280
  %v1282 = vrot.slane %v1265, %v1281
  %v1283 = vlaneseq
  %v1284 = vshrl.u32 %v1283, 7
  %v1285 = vsub.s32 0, %v1284
  %v1286 = vrot.slane %v1248, %v1285
  %v1287 = vlaneseq
  %v1288 = vshrl.u32 %v1287, 7
  %v1289 = vsub.s32 0, %v1288
  %v1290 = vrot.slane %v1262, %v1289
  %v1291 = vlaneseq
  %v1292 = vshrl.u32 %v1291, 7
  %v1293 = vsub.s32 0, %v1292
  %v1294 = vrot.slane %v1264, %v1293
  %v1295 = vlaneseq
  %v1296 = vshrl.u32 %v1295, 7
  %v1297 = vsub.s32 0, %v1296
  %v1298 = vrot.slane %v1266, %v1297
  %v1307 = vmul.f32 %v771, %v1270
  %v1308 = vmul.f32 %v776, %v1274
  %v1309 = vmul.f32 %v781, %v1278
  %v1310 = vmul.f32 %v786, %v1282
  %v1311 = vmul.f32 %v791, %v1286
  %v1312 = vmul.f32 %v796, %v1290
  %v1313 = vmul.f32 %v801, %v1294
  %v1314 = vmul.f32 %v806, %v1298
  %1323 = vrot.lane.b32.xlu0 %v1307, 96
  %v1324 = vpop.permute.xlu0 %1323
  %1325 = vrot.lane.b32.xlu0 %v1308, 96
  %v1326 = vpop.permute.xlu0 %1325
  %1327 = vrot.lane.b32.xlu0 %v1309, 96
  %v1328 = vpop.permute.xlu0 %1327
  %1329 = vrot.lane.b32.xlu0 %v1310, 96
  %v1330 = vpop.permute.xlu0 %1329
  %1331 = vrot.lane.b32.xlu0 %v1311, 96
  %v1332 = vpop.permute.xlu0 %1331
  %1333 = vrot.lane.b32.xlu0 %v1312, 96
  %v1334 = vpop.permute.xlu0 %1333
  %1335 = vrot.lane.b32.xlu0 %v1313, 96
  %v1336 = vpop.permute.xlu0 %1335
  %1337 = vrot.lane.b32.xlu0 %v1314, 96
  %v1338 = vpop.permute.xlu0 %1337
  %v1347 = vadd.f32 %v1209, %v1324
  %v1348 = vadd.f32 %v1210, %v1326
  %v1349 = vadd.f32 %v1211, %v1328
  %v1350 = vadd.f32 %v1212, %v1330
  %v1351 = vadd.f32 %v1213, %v1332
  %v1352 = vadd.f32 %v1214, %v1334
  %v1353 = vadd.f32 %v1215, %v1336
  %v1354 = vadd.f32 %v1216, %v1338
  %1356 = vrot.lane.b32.xlu0 %v902, 64
  %v1357 = vpop.permute.xlu0 %1356
  %v1359 = vsel %vm48, %v1024, %v986
  %vm1360 = vcmask 523264
  %v1361 = vsel %vm1360, %v1359, %v1357
  %vm1362 = vcmask 785408
  %v1363 = vsel %vm1362, %v1361, 0.0
  %1364 = vst [vmem:[%s4] sm:$0xff] %v1363
  %1365 = vst.msk [vmem:[%s5] sm:$0xff] %vm48, %v1347
  %1366 = vst.msk [vmem:[%s5 + $0x8] sm:$0xff] %vm48, %v1348
  %1367 = vst.msk [vmem:[%s5 + $0x10] sm:$0xff] %vm48, %v1349
  %1368 = vst.msk [vmem:[%s5 + $0x18] sm:$0xff] %vm48, %v1350
  %1369 = vst.msk [vmem:[%s5 + $0x20] sm:$0xff] %vm48, %v1351
  %1370 = vst.msk [vmem:[%s5 + $0x28] sm:$0xff] %vm48, %v1352
  %1371 = vst.msk [vmem:[%s5 + $0x30] sm:$0xff] %vm48, %v1353
  %1372 = vst.msk [vmem:[%s5 + $0x38] sm:$0xff] %vm48, %v1354
  // Predicated region
  $region18: #{ntm_cell_forward.1} parent=0 // pred_check
    _
  $region19: #{ntm_cell_forward.1} parent=0 // pred_check_branch
    %1374 = sbr.rel (0) target = $region21
  $region20: #{ntm_cell_forward.1} parent=0 // pred_region
    _
  $region21: #{ntm_cell_forward.1} parent=0 // pred_fallthru
    _
  // Predicated region
  $region22: #{ntm_cell_forward.1} parent=0 // pred_check
    _
  $region23: #{ntm_cell_forward.1} parent=0 // pred_check_branch
    %1376 = sbr.rel (0) target = $region25
  $region24: #{ntm_cell_forward.1} parent=0 // pred_region
    _
  $region25: #{ntm_cell_forward.1} parent=0 // pred_fallthru
    _
  // Predicated region
  $region26: #{ntm_cell_forward.1} parent=0 // pred_check
    _
  $region27: #{ntm_cell_forward.1} parent=0 // pred_check_branch
    %1378 = sbr.rel (0) target = $region29
  $region28: #{ntm_cell_forward.1} parent=0 // pred_region
    _
  $region29: #{ntm_cell_forward.1} parent=0 // pred_fallthru
    _
  // Predicated region
  $region30: #{ntm_cell_forward.1} parent=0 // pred_check
    _
  $region31: #{ntm_cell_forward.1} parent=0 // pred_check_branch
    %1380 = sbr.rel (0) target = $region33
  $region32: #{ntm_cell_forward.1} parent=0 // pred_region
    _
  $region33: #{ntm_cell_forward.1} parent=0 // pred_fallthru
    _

</llo_original>
